<compile_context>
chip_gen: v6e
topology: v6e:2x2x1
jax: 0.10.0
libtpu: 0.0.40
codegen_flags: <defaults>
</compile_context>

<pallas_src>
import functools

import numpy as np

import jax
import jax.numpy as jnp
from jax.experimental import pallas as pl
from jax.experimental.pallas import tpu as pltpu


def _round_up(x: int, m: int) -> int:
    return (x + m - 1) // m * m


def _cdiv(a: int, b: int) -> int:
    return (a + b - 1) // b


def _leaky(y, neg_slope):
    # LeakyReLU(y) == max(y, a*y) for 0 < a < 1: one VPU op instead of cmp+select.
    return jnp.maximum(y, neg_slope * y)


def _col_sums(s):
    # Per-row sum and sum-of-squares via the MXU (frees the XLU); padded lanes
    # are zero and contribute nothing.
    ones = jnp.ones((s.shape[-1], 1), dtype=jnp.float32)
    ssum = jnp.dot(s, ones, preferred_element_type=jnp.float32)
    ssq = jnp.dot(s * s, ones, preferred_element_type=jnp.float32)
    return ssum, ssq


def _make_spec(block_shape, index_map, buffers=None):
    """BlockSpec with optional deeper input pipelining (graceful fallback)."""
    if buffers is not None and hasattr(pl, "Buffered"):
        try:
            return pl.BlockSpec(block_shape, index_map,
                                pipeline_mode=pl.Buffered(buffers))
        except TypeError:
            pass
    return pl.BlockSpec(block_shape, index_map)


# --------------------------------------------------------------------------
# Kernels
# --------------------------------------------------------------------------

def _conv_act_kernel(cols_ref, w_ref, o_ref, *, neg_slope):
    """norm=False path: conv tile + LeakyReLU."""
    # cols_ref: [K_p, T]   w_ref: [Cout_p, K_p]   o_ref: [Cout_p, T]
    s = jnp.dot(w_ref[...], cols_ref[...], preferred_element_type=jnp.float32)
    o_ref[...] = _leaky(s, neg_slope).astype(o_ref.dtype)


def _conv_norm_act_kernel(cols_ref, w_ref, o_ref, *, inv_hw, eps, neg_slope):
    """Fully fused path: whole padded spatial extent in one lane-dense block."""
    s = jnp.dot(w_ref[...], cols_ref[...], preferred_element_type=jnp.float32)
    ssum, ssq = _col_sums(s)                         # [Cout_p, 1] each
    mean = ssum * inv_hw
    var = jnp.maximum(ssq * inv_hw - mean * mean, 0.0)
    y = (s - mean) * jax.lax.rsqrt(var + eps)
    o_ref[...] = _leaky(y, neg_slope).astype(o_ref.dtype)


def _conv_stats_kernel(cols_ref, w_ref, y_ref, sum_ref, sumsq_ref):
    """Tiled pass 1: conv tile + per-tile partial sum/sumsq (fully parallel)."""
    s = jnp.dot(w_ref[...], cols_ref[...], preferred_element_type=jnp.float32)
    y_ref[...] = s.astype(y_ref.dtype)
    ssum, ssq = _col_sums(s)
    sum_ref[...] = ssum
    sumsq_ref[...] = ssq


def _norm_act_kernel(y_ref, sum_ref, sumsq_ref, o_ref, *, inv_hw, eps, neg_slope):
    """Tiled pass 2: InstanceNorm + LeakyReLU on a lane-dense tile."""
    s = y_ref[...].astype(jnp.float32)               # [Cout_p, T]
    mean = sum_ref[...] * inv_hw                     # [Cout_p, 1]
    var = jnp.maximum(sumsq_ref[...] * inv_hw - mean * mean, 0.0)
    y = (s - mean) * jax.lax.rsqrt(var + eps)
    o_ref[...] = _leaky(y, neg_slope).astype(o_ref.dtype)


# --------------------------------------------------------------------------
# Wrapper
# --------------------------------------------------------------------------

@functools.partial(jax.jit,
                   static_argnames=("norm", "eps", "neg_slope",
                                    "compute_dtype", "tile_hw"))
def downsample(x, weight, *, norm: bool = True, eps: float = 1e-5,
               neg_slope: float = 0.01, compute_dtype=None, tile_hw=None):
    """Forward pass of Downsample.

    x:       [N, Cin, H, W]    (NCHW, matches PyTorch)
    weight:  [Cout, Cin, k, k] (PyTorch Conv2d weight layout)
    returns  [N, Cout, ceil(H/2), ceil(W/2)]   (NCHW)

    compute_dtype: MXU operand dtype.  Defaults to bf16 (fast path on
    v5e/v6e/v7x); accumulation / norm / activation always stay in f32.
    """
    n, cin, h, w = x.shape
    cout, cin_w, k, k_w = weight.shape
    assert cin_w == cin and k_w == k
    stride = 2
    pad = (k - 1) // 2
    hout = (h + 2 * pad - k) // stride + 1
    wout = (w + 2 * pad - k) // stride + 1
    hw = hout * wout

    out_dtype = x.dtype
    cdt = jnp.bfloat16 if compute_dtype is None else compute_dtype
    in_item = np.dtype(cdt).itemsize
    out_item = np.dtype(out_dtype).itemsize

    # ---- TPU-friendly padded dims --------------------------------------------
    kdim = k * k * cin
    k_p = _round_up(kdim, 16)            # sublane/bf16-pack aligned contraction
    cout_p = _round_up(cout, 8)          # sublane aligned output channels

    # ---- generation-aware VMEM budget + balanced spatial tiling --------------
    try:
        info = pltpu.get_tpu_info()
        vmem_cap = int(getattr(info, "vmem_capacity_bytes", 64 << 20))
    except Exception:
        vmem_cap = 64 << 20              # conservative (v7x-sized) fallback
    if vmem_cap <= 0:
        vmem_cap = 64 << 20

    budget = min(int(0.70 * vmem_cap), 100 << 20)
    max_tile = 8192 if vmem_cap > (80 << 20) else 4096
    # Rough per-lane footprint: up to 3 buffered cols tiles + f32/out tiles.
    per_col = 3 * k_p * in_item + 6 * cout_p * 4

    hw128 = _round_up(hw, 128)
    if tile_hw is None:
        tile_cap = max(128, min(max_tile, budget // per_col))
    else:
        tile_cap = max(128, int(tile_hw))
        tile_cap = min(tile_cap, max(128, budget // per_col))  # re-validate vs VMEM
    tile_cap = max(128, (tile_cap // 128) * 128)
    tile_cap = min(tile_cap, hw128)
    num_t = _cdiv(hw128, tile_cap)
    tile = _round_up(_cdiv(hw128, num_t), 128)
    hw_p = num_t * tile                  # worst case <128 wasted lanes per batch

    vlim = (3 * k_p * tile * in_item             # cols tiles (up to Buffered(3))
            + 2 * cout_p * k_p * in_item         # weights (double-buffered)
            + 2 * cout_p * tile * max(out_item, in_item)   # y in/out tiles
            + 4 * cout_p * tile * 4              # f32 intermediates (s, s*s, ...)
            + 64 * cout_p * 4                    # stats
            + (4 << 20))                         # Mosaic scratch / DMA headroom
    vlim_cap = max(8 << 20, min(vmem_cap - (12 << 20), 110 << 20))
    vlim = int(min(max(vlim, 8 << 20), vlim_cap))

    # ---- tap-major, channels-first patch slab [N, K, HW] (bf16 by default) ---
    # TODO(synk): replace this XLA-side slab with in-kernel strided DMAs from
    # the padded input (memory_space=pl.ANY) to cut the remaining round-trip.
    pad_b = max(0, stride * (hout - 1) + k - (h + pad))
    pad_r = max(0, stride * (wout - 1) + k - (w + pad))
    xp = jnp.pad(x, ((0, 0), (0, 0), (pad, pad_b), (pad, pad_r)))
    taps = [xp[:, :, ky:ky + stride * hout:stride, kx:kx + stride * wout:stride]
            for ky in range(k) for kx in range(k)]          # each [N, Cin, Hout, Wout]
    cols = jnp.concatenate(taps, axis=1)                    # [N, k*k*Cin, Hout, Wout]
    cols = cols.reshape(n, kdim, hw)                        # free row-major collapse
    cols = jnp.pad(cols, ((0, 0), (0, k_p - kdim), (0, hw_p - hw))).astype(cdt)

    # Weight as [Cout_p, K_p], tap-major then Cin (matches the concat order).
    w_mat = weight.transpose(0, 2, 3, 1).reshape(cout, kdim)
    w_mat = jnp.pad(w_mat, ((0, cout_p - cout), (0, k_p - kdim))).astype(cdt)

    inv_hw = 1.0 / float(hw)

    # ---- specs ---------------------------------------------------------------
    cols_spec = _make_spec((None, k_p, tile), lambda i, t: (i, 0, t))
    cols_spec_b3 = _make_spec((None, k_p, tile), lambda i, t: (i, 0, t), buffers=3)
    w_spec = pl.BlockSpec((cout_p, k_p), lambda i, t: (0, 0))
    out_spec = pl.BlockSpec((None, cout_p, tile), lambda i, t: (i, 0, t))
    stat_red_spec = pl.BlockSpec((None, cout_p, 1), lambda i, t: (i, 0, 0))
    stat_part_spec = pl.BlockSpec((None, None, cout_p, 1), lambda i, t: (i, t, 0, 0))

    if not norm:
        kern = functools.partial(_conv_act_kernel, neg_slope=neg_slope)
        y = pl.pallas_call(
            kern,
            out_shape=jax.ShapeDtypeStruct((n, cout_p, hw_p), out_dtype),
            grid_spec=pltpu.PrefetchScalarGridSpec(
                num_scalar_prefetch=0, grid=(n, num_t),
                in_specs=[cols_spec_b3, w_spec], out_specs=out_spec),
            compiler_params=pltpu.CompilerParams(
                dimension_semantics=("parallel", "parallel"),
                vmem_limit_bytes=vlim),
        )(cols, w_mat)
    elif num_t == 1:
        # Fully fused: conv + instance-norm + LeakyReLU in one kernel.
        kern = functools.partial(_conv_norm_act_kernel, inv_hw=inv_hw,
                                 eps=eps, neg_slope=neg_slope)
        y = pl.pallas_call(
            kern,
            out_shape=jax.ShapeDtypeStruct((n, cout_p, hw_p), out_dtype),
            grid_spec=pltpu.PrefetchScalarGridSpec(
                num_scalar_prefetch=0, grid=(n, 1),
                in_specs=[cols_spec, w_spec], out_specs=out_spec),
            compiler_params=pltpu.CompilerParams(
                dimension_semantics=("parallel", "parallel"),
                vmem_limit_bytes=vlim),
        )(cols, w_mat)
    else:
        # Pass 1 (fully parallel, both TCs usable on v7x even at N=1): conv
        # tiles in the compute dtype + per-tile partial sum/sumsq in f32.
        y_raw, psum, psumsq = pl.pallas_call(
            _conv_stats_kernel,
            out_shape=(jax.ShapeDtypeStruct((n, cout_p, hw_p), cdt),
                       jax.ShapeDtypeStruct((n, num_t, cout_p, 1), jnp.float32),
                       jax.ShapeDtypeStruct((n, num_t, cout_p, 1), jnp.float32)),
            grid_spec=pltpu.PrefetchScalarGridSpec(
                num_scalar_prefetch=0, grid=(n, num_t),
                in_specs=[cols_spec, w_spec],
                out_specs=(out_spec if cdt == out_dtype else
                           pl.BlockSpec((None, cout_p, tile),
                                        lambda i, t: (i, 0, t)),
                           stat_part_spec, stat_part_spec)),
            compiler_params=pltpu.CompilerParams(
                dimension_semantics=("parallel", "parallel"),
                vmem_limit_bytes=vlim),
        )(cols, w_mat)

        # Tiny cross-tile reduction of the partial statistics in XLA.
        csum = jnp.sum(psum, axis=1)       # [N, Cout_p, 1]
        csumsq = jnp.sum(psumsq, axis=1)   # [N, Cout_p, 1]

        # Pass 2: normalize + LeakyReLU (short, lane-dense, fully parallel).
        kern = functools.partial(_norm_act_kernel, inv_hw=inv_hw,
                                 eps=eps, neg_slope=neg_slope)
        y = pl.pallas_call(
            kern,
            out_shape=jax.ShapeDtypeStruct((n, cout_p, hw_p), out_dtype),
            grid_spec=pltpu.PrefetchScalarGridSpec(
                num_scalar_prefetch=0, grid=(n, num_t),
                in_specs=[_make_spec((None, cout_p, tile),
                                     lambda i, t: (i, 0, t), buffers=3),
                          stat_red_spec, stat_red_spec],
                out_specs=out_spec),
            compiler_params=pltpu.CompilerParams(
                dimension_semantics=("parallel", "parallel"),
                vmem_limit_bytes=vlim),
        )(y_raw, csum, csumsq)

    # Strip channel / lane padding; [N, Cout, HW] is already NCHW order.
    y = y[:, :cout, :hw].reshape(n, cout, hout, wout)
    return y


# --------------------------------------------------------------------------
# Plain-JAX reference (for the silent self-check)
# --------------------------------------------------------------------------

def _reference(x_nchw, weight_oikk, norm=True, eps=1e-5, neg_slope=0.01):
    k = weight_oikk.shape[-1]
    pad = (k - 1) // 2
    out = jax.lax.conv_general_dilated(
        x_nchw, weight_oikk, window_strides=(2, 2),
        padding=((pad, pad), (pad, pad)),
        dimension_numbers=("NCHW", "OIHW", "NCHW"))
    if norm:
        mean = jnp.mean(out, axis=(2, 3), keepdims=True)
        var = jnp.mean((out - mean) ** 2, axis=(2, 3), keepdims=True)
        out = (out - mean) * jax.lax.rsqrt(var + eps)
    return jnp.where(out >= 0, out, neg_slope * out)


if __name__ == "__main__":
    key = jax.random.PRNGKey(0)
    ka, kb, kc, kd = jax.random.split(key, 4)

    # Case 1: fused single-pass path, f32 operands (tight tolerance).
    N, Cin, Cout, H, W, K = 2, 4, 8, 16, 16, 3
    x = jax.random.normal(ka, (N, Cin, H, W), dtype=jnp.float32)
    wgt = jax.random.normal(kb, (Cout, Cin, K, K), dtype=jnp.float32) * 0.1

    y = jax.block_until_ready(downsample(x, wgt, norm=True,
                                         compute_dtype=jnp.float32))
    y_ref = _reference(x, wgt, norm=True)
    assert y.shape == (N, Cout, H // 2, W // 2), y.shape
    assert jnp.allclose(y, y_ref, atol=1e-4, rtol=1e-4), \
        float(jnp.max(jnp.abs(y - y_ref)))

    # Case 2: tiled two-pass path (per-tile partial stats + XLA reduce), f32.
    N2, Cin2, Cout2, H2, W2 = 2, 8, 16, 32, 32
    x2 = jax.random.normal(kc, (N2, Cin2, H2, W2), dtype=jnp.float32)
    w2 = jax.random.normal(kd, (Cout2, Cin2, K, K), dtype=jnp.float32) * 0.1
    y2 = jax.block_until_ready(downsample(x2, w2, norm=True, tile_hw=128,
                                          compute_dtype=jnp.float32))
    y2_ref = _reference(x2, w2, norm=True)
    assert y2.shape == (N2, Cout2, H2 // 2, W2 // 2), y2.shape
    assert jnp.allclose(y2, y2_ref, atol=1e-4, rtol=1e-4), \
        float(jnp.max(jnp.abs(y2 - y2_ref)))

    # Case 3: norm=False path, f32 operands.
    y3 = jax.block_until_ready(downsample(x, wgt, norm=False,
                                          compute_dtype=jnp.float32))
    y3_ref = _reference(x, wgt, norm=False)
    assert jnp.allclose(y3, y3_ref, atol=1e-4, rtol=1e-4)

    # Case 4: default path — bf16 MXU operands, f32 accumulation (looser tol).
    y4 = jax.block_until_ready(downsample(x, wgt, norm=True))
    assert jnp.allclose(y4, y_ref, atol=8e-2, rtol=8e-2)

    # Case 5: default bf16 operands on the tiled two-pass path.
    y5 = jax.block_until_ready(downsample(x2, w2, norm=True, tile_hw=128))
    assert jnp.allclose(y5, y2_ref, atol=8e-2, rtol=8e-2)

    print("KERNEL_OK")
</pallas_src>

<mosaic_0001>
module attributes {stable_mosaic.version = 11 : i64} {
  func.func @_conv_norm_act_kernel(%arg0: i32, %arg1: i32, %arg2: memref<1x48x128xf32, #tpu.memory_space<vmem>>, %arg3: memref<8x48xf32, #tpu.memory_space<vmem>>, %arg4: memref<1x8x128xf32, #tpu.memory_space<vmem>>) attributes {dimension_semantics = [#tpu.dimension_semantics<parallel>, #tpu.dimension_semantics<parallel>], iteration_bounds = array<i64: 2, 1>, scalar_prefetch = 0 : i64, scratch_operands = 0 : i64, tpu.core_type = #tpu.core_type<tc>, window_params = [{transform_indices = @transform_0, window_bounds = array<i64: 1, 48, 128>}, {pipeline_mode = #tpu.pipeline_mode<synchronous>, transform_indices = @transform_1, window_bounds = array<i64: 8, 48>}, {transform_indices = @transform_2, window_bounds = array<i64: 1, 8, 128>}]} {
    %c0 = arith.constant 0 : index
    %c0_0 = arith.constant 0 : index
    %0 = vector.load %arg3[%c0, %c0_0] : memref<8x48xf32, #tpu.memory_space<vmem>>, vector<8x48xf32>
    %c0_1 = arith.constant 0 : index
    %c0_2 = arith.constant 0 : index
    %c0_3 = arith.constant 0 : index
    %1 = vector.load %arg2[%c0_1, %c0_2, %c0_3] : memref<1x48x128xf32, #tpu.memory_space<vmem>>, vector<1x48x128xf32>
    %2 = vector.shape_cast %1 : vector<1x48x128xf32> to vector<48x128xf32>
    %cst = arith.constant dense<0.000000e+00> : vector<8x128xf32>
    %3 = tpu.matmul %0, %2, %cst {dimension_numbers = #tpu.dot_dimension_numbers<[1], [0], [0], [1], [0, 0, 1, 1], [], []>} : vector<8x48xf32>, vector<48x128xf32>, vector<8x128xf32> -> vector<8x128xf32>
    %cst_4 = arith.constant 1.000000e+00 : f32
    %4 = vector.broadcast %cst_4 : f32 to vector<128x1xf32>
    %cst_5 = arith.constant dense<0.000000e+00> : vector<8x1xf32>
    %5 = tpu.matmul %3, %4, %cst_5 {dimension_numbers = #tpu.dot_dimension_numbers<[1], [0], [0], [1], [0, 0, 1, 1], [], []>} : vector<8x128xf32>, vector<128x1xf32>, vector<8x1xf32> -> vector<8x1xf32>
    %6 = arith.mulf %3, %3 : vector<8x128xf32>
    %cst_6 = arith.constant dense<0.000000e+00> : vector<8x1xf32>
    %7 = tpu.matmul %6, %4, %cst_6 {dimension_numbers = #tpu.dot_dimension_numbers<[1], [0], [0], [1], [0, 0, 1, 1], [], []>} : vector<8x128xf32>, vector<128x1xf32>, vector<8x1xf32> -> vector<8x1xf32>
    %cst_7 = arith.constant 1.562500e-02 : f32
    %8 = vector.broadcast %cst_7 : f32 to vector<8x1xf32>
    %9 = arith.mulf %5, %8 : vector<8x1xf32>
    %cst_8 = arith.constant 1.562500e-02 : f32
    %10 = vector.broadcast %cst_8 : f32 to vector<8x1xf32>
    %11 = arith.mulf %7, %10 : vector<8x1xf32>
    %12 = arith.mulf %9, %9 : vector<8x1xf32>
    %13 = arith.subf %11, %12 : vector<8x1xf32>
    %cst_9 = arith.constant 0.000000e+00 : f32
    %14 = vector.broadcast %cst_9 : f32 to vector<8x1xf32>
    %15 = arith.maximumf %13, %14 : vector<8x1xf32>
    %16 = vector.broadcast %9 : vector<8x1xf32> to vector<8x128xf32>
    %17 = arith.subf %3, %16 : vector<8x128xf32>
    %cst_10 = arith.constant 9.99999974E-6 : f32
    %18 = vector.broadcast %cst_10 : f32 to vector<8x1xf32>
    %19 = arith.addf %15, %18 : vector<8x1xf32>
    %20 = math.rsqrt %19 : vector<8x1xf32>
    %21 = vector.broadcast %20 : vector<8x1xf32> to vector<8x128xf32>
    %22 = arith.mulf %17, %21 : vector<8x128xf32>
    %cst_11 = arith.constant 0.00999999977 : f32
    %23 = vector.broadcast %cst_11 : f32 to vector<8x128xf32>
    %24 = arith.mulf %23, %22 : vector<8x128xf32>
    %25 = arith.maximumf %22, %24 : vector<8x128xf32>
    %c0_12 = arith.constant 0 : index
    %c0_13 = arith.constant 0 : index
    %c0_14 = arith.constant 0 : index
    %26 = vector.load %arg4[%c0_12, %c0_13, %c0_14] : memref<1x8x128xf32, #tpu.memory_space<vmem>>, vector<1x8x128xf32>
    %27 = vector.shape_cast %26 : vector<1x8x128xf32> to vector<8x128xf32>
    %28 = vector.shape_cast %25 : vector<8x128xf32> to vector<1x8x128xf32>
    tpu.vector_store %arg4[%c0_12, %c0_13, %c0_14], %28 {strides = array<i32>} : memref<1x8x128xf32, #tpu.memory_space<vmem>>, vector<1x8x128xf32>,
    return
  }
  func.func @transform_0(%arg0: i32, %arg1: i32) -> (i32, i32, i32) {
    %c0_i32 = arith.constant 0 : i32
    %c0_i32_0 = arith.constant 0 : i32
    return %arg0, %c0_i32, %arg1 : i32, i32, i32
  }
  func.func @transform_1(%arg0: i32, %arg1: i32) -> (i32, i32) {
    %c0_i32 = arith.constant 0 : i32
    %c0_i32_0 = arith.constant 0 : i32
    %c0_i32_1 = arith.constant 0 : i32
    return %c0_i32, %c0_i32_0 : i32, i32
  }
  func.func @transform_2(%arg0: i32, %arg1: i32) -> (i32, i32, i32) {
    %c0_i32 = arith.constant 0 : i32
    %c0_i32_0 = arith.constant 0 : i32
    return %arg0, %c0_i32, %arg1 : i32, i32, i32
  }
}

</mosaic_0001>

<llo_original>
// kernel: downsample.1
$region0: #{downsample.1}
  #allocation0 [shape = 'u32[]', space=smem, size = 0x4, offset = 0x4, fixed_abs, tag = 'smem constant byte address 0x4 - core index']
  #allocation1 [shape = 'u32[144,128]{1,0:T(1,128)}', space=vmem, size = 0x12000, scoped, tag = 'internal scratch']
  %s0 = inlined_call_operand.vmem [shape: f32[2,48,128], index: 0, kind: input, shape index: {}]
  %s1 = inlined_call_operand.vmem [shape: f32[8,48], index: 1, kind: input, shape index: {}]
  %s2 = inlined_call_operand.vmem [shape: f32[2,8,128], index: 2, kind: output, shape index: {}]
  %s3 = sld [smem:[#allocation0]]
  $region41: #{downsample.1} parent=0
    _
  %s5 = ssub.s32 1, %s3
  %s6 = scalar_select 0, %s5, %s3
  loop: start=0, step=1, limit=4
  $region2: #{downsample.1} parent=0 // loop_pre_header
    _
  $region3: #{downsample.1} parent=0 // loop_header
    %s8 = sphi 0, %s12
    %p9 = scmp.ge.s32.totalorder %s8, 4
    %s15 = sphi 0, %s27
    %s16 = sphi 0, %s23
    %s17 = sphi 0, %s15
    %s18 = sphi 0, %s16
    %s19 = sphi 0, %s17
    %s20 = sphi 0, %s18
    %s32 = sphi 0, %s34
    %s35 = sphi 0, %s32
    %s36 = sphi 0, %s35
    %s52 = sphi 0, %s36
    %s56 = sphi 0, %s56
    %s58 = sphi 0, %s56
    %s59 = sphi 0, %s58
    %s73 = sphi 0, %s59
    %s81 = sphi 0, %s83
    %s84 = sphi 0, %s81
    %s85 = sphi 0, %s84
    %s101 = sphi 0, %s85
  $region4: #{downsample.1} parent=0 // loop_header_branch
    %11 = sbr.rel (%p9) target = $region8
  $region5: #{downsample.1} parent=0 // loop_body
    %s13 = ssub.s32 %s8, 1
    %s14 = ssub.s32 %s8, 2
    %s21 = sadd.s32 1, %s16
    %p22 = scmp.ge.s32.totalorder %s21, 1
    %s23 = scalar_select %p22, 0, %s21
    %s24 = sadd.s32 1, %s15
    %s25 = scalar_select %p22, %s24, %s15
    %p26 = scmp.ge.s32.totalorder %s25, 2
    %s27 = scalar_select %p26, 0, %s25
    %s28 = ssub.s32 %s15, %s27
    %s29 = ssub.s32 %s16, %s23
    %s30 = sor.u32 %s28, %s29
    %p31 = scmp.eq.s32.totalorder %s30, 0
    %s33 = sadd.s32 %s32, 1
    %s34 = scalar_select %p31, %s32, %s33
    %p37 = pneg %p31
    %p38 = scmp.eq.s32.totalorder %s8, 1
    %p39 = por %p37, %p38
    %p40 = scmp.ne.s32.totalorder %s32, %s35
    %p41 = scmp.eq.s32.totalorder %s8, 0
    %p42 = por %p40, %p41
    %p43 = scmp.ne.s32.totalorder %s32, %s35
    %p44 = scmp.eq.s32.totalorder %s13, 1
    %p45 = por %p43, %p44
    %p46 = scmp.ne.s32.totalorder %s35, %s36
    %p47 = scmp.eq.s32.totalorder %s13, 0
    %p48 = por %p46, %p47
    %p49 = scmp.ne.s32.totalorder %s35, %s36
    %p50 = scmp.eq.s32.totalorder %s14, 1
    %p51 = por %p49, %p50
    %p53 = scmp.ne.s32.totalorder %s36, %s52
    %p54 = scmp.eq.s32.totalorder %s14, 0
    %p55 = por %p53, %p54
    %s57 = sadd.s32 %s56, 1
    %p60 = scmp.eq.s32.totalorder %s8, 1
    %p61 = scmp.ne.s32.totalorder %s56, %s58
    %p62 = scmp.eq.s32.totalorder %s8, 0
    %p63 = por %p61, %p62
    %p64 = scmp.ne.s32.totalorder %s56, %s58
    %p65 = scmp.eq.s32.totalorder %s13, 1
    %p66 = por %p64, %p65
    %p67 = scmp.ne.s32.totalorder %s58, %s59
    %p68 = scmp.eq.s32.totalorder %s13, 0
    %p69 = por %p67, %p68
    %p70 = scmp.ne.s32.totalorder %s58, %s59
    %p71 = scmp.eq.s32.totalorder %s14, 1
    %p72 = por %p70, %p71
    %p74 = scmp.ne.s32.totalorder %s59, %s73
    %p75 = scmp.eq.s32.totalorder %s14, 0
    %p76 = por %p74, %p75
    %s77 = ssub.s32 %s15, %s27
    %s78 = ssub.s32 %s16, %s23
    %s79 = sor.u32 %s77, %s78
    %p80 = scmp.eq.s32.totalorder %s79, 0
    %s82 = sadd.s32 %s81, 1
    %s83 = scalar_select %p80, %s81, %s82
    %p86 = pneg %p80
    %p87 = scmp.eq.s32.totalorder %s8, 1
    %p88 = por %p86, %p87
    %p89 = scmp.ne.s32.totalorder %s81, %s84
    %p90 = scmp.eq.s32.totalorder %s8, 0
    %p91 = por %p89, %p90
    %p92 = scmp.ne.s32.totalorder %s81, %s84
    %p93 = scmp.eq.s32.totalorder %s13, 1
    %p94 = por %p92, %p93
    %p95 = scmp.ne.s32.totalorder %s84, %s85
    %p96 = scmp.eq.s32.totalorder %s13, 0
    %p97 = por %p95, %p96
    %p98 = scmp.ne.s32.totalorder %s84, %s85
    %p99 = scmp.eq.s32.totalorder %s14, 1
    %p100 = por %p98, %p99
    %p102 = scmp.ne.s32.totalorder %s85, %s101
    %p103 = scmp.eq.s32.totalorder %s14, 0
    %p104 = por %p102, %p103
    %p105 = scmp.le.s32.totalorder 1, %s8
    %p106 = scmp.lt.s32.totalorder %s8, 3
    %p107 = pnand %p105, %p106
    %p108 = pneg %p107
    // Predicated region
    $region9: #{downsample.1} parent=5 // pred_check
      _
    $region10: #{downsample.1} parent=5 // pred_check_branch
      %110 = sbr.rel (%p107) target = $region12
    $region11: #{downsample.1} parent=5 // pred_region
      %s111 = ssub.s32 %s8, 1
      // Predicated region
      $region13: #{downsample.1} parent=11 // pred_check
        %p112 = pneg %p69
      $region14: #{downsample.1} parent=11 // pred_check_branch
        %114 = sbr.rel (%p112) target = $region16
      $region15: #{downsample.1} parent=11 // pred_region
        _
      $region16: #{downsample.1} parent=11 // pred_fallthru
        _
    $region12: #{downsample.1} parent=5 // pred_fallthru
      _
    %p115 = scmp.lt.s32.totalorder %s8, 2
    // Predicated region
    $region17: #{downsample.1} parent=5 // pred_check
      %p116 = pneg %p115
    $region18: #{downsample.1} parent=5 // pred_check_branch
      %118 = sbr.rel (%p116) target = $region20
    $region19: #{downsample.1} parent=5 // pred_region
      // Predicated region
      $region21: #{downsample.1} parent=19 // pred_check
        %p119 = pneg %p42
      $region22: #{downsample.1} parent=19 // pred_check_branch
        %121 = sbr.rel (%p119) target = $region24
      $region23: #{downsample.1} parent=19 // pred_region
        %p122 = scmp.lt.s32.totalorder %s15, 1
        %s123 = scalar_select %p122, %s15, 1
        %p124 = scmp.lt.s32.totalorder %s16, 0
        %s125 = scalar_select %p124, %s16, 0
        %s126 = smul.addr %s123, 6
        %s127 = sadd.s32 %s125, %s126
        %s128 = smul.addr %s127, 8
        %s129 = scalar_lea.vmem %s0, %s128
      $region24: #{downsample.1} parent=19 // pred_fallthru
        _
    $region20: #{downsample.1} parent=5 // pred_fallthru
      _
    %p130 = scmp.le.s32.totalorder 1, %s8
    %p131 = scmp.lt.s32.totalorder %s8, 3
    %p132 = pnand %p130, %p131
    %p133 = pneg %p132
    // Predicated region
    $region25: #{downsample.1} parent=5 // pred_check
      _
    $region26: #{downsample.1} parent=5 // pred_check_branch
      %135 = sbr.rel (%p132) target = $region28
    $region27: #{downsample.1} parent=5 // pred_region
      %s136 = ssub.s32 %s8, 1
      %p137 = scmp.lt.s32.totalorder %s17, 1
      %s138 = scalar_select %p137, %s17, 1
      %p139 = scmp.lt.s32.totalorder %s18, 0
      %s140 = scalar_select %p139, %s18, 0
      %s141 = smul.addr %s138, 6
      %s142 = sadd.s32 %s140, %s141
      %s143 = smul.addr %s142, 8
      %s144 = scalar_lea.vmem %s0, %s143
      %p145 = pneg %p48
      %p146 = pneg %p45
      %p147 = pneg %p69
      %p148 = pneg %p66
      %p149 = pneg %p97
      %p150 = pneg %p94
      %p151 = scmp.lt.s32.totalorder %s17, 1
      %s152 = scalar_select %p151, %s17, 1
      %p153 = scmp.lt.s32.totalorder %s18, 0
      %s154 = scalar_select %p153, %s18, 0
      %s155 = sadd.s32 %s154, %s152
      %s156 = smul.addr %s155, 8
      %s157 = scalar_lea.vmem %s2, %s156
      %p158 = scmp.lt.s32.totalorder %s17, 1
      %s159 = scalar_select %p158, %s17, 1
      %p160 = scmp.lt.s32.totalorder %s18, 0
      %s161 = scalar_select %p160, %s18, 0
      %s162 = smul.addr %s159, 6
      %s163 = sadd.s32 %s161, %s162
      %s164 = smul.addr %s163, 8
      %s165 = scalar_lea.vmem %s0, %s164
      %p166 = scmp.lt.s32.totalorder %s17, 1
      %s167 = scalar_select %p166, %s17, 1
      %p168 = scmp.lt.s32.totalorder %s18, 0
      %s169 = scalar_select %p168, %s18, 0
      %s170 = sadd.s32 %s169, %s167
      %s171 = smul.addr %s170, 8
      %s172 = scalar_lea.vmem %s2, %s171
      %v173 = vld [vmem:[%s1] sm:$0xff]
      %v174 = vld [vmem:[%s165] sm:$0xff]
      %v175 = vld [vmem:[%s165 + $0x8] sm:$0xff]
      %v176 = vld [vmem:[%s165 + $0x10] sm:$0xff]
      %v177 = vld [vmem:[%s165 + $0x18] sm:$0xff]
      %v178 = vld [vmem:[%s165 + $0x20] sm:$0xff]
      %v179 = vld [vmem:[%s165 + $0x28] sm:$0xff]
      %vm180 = vcmask 392192
      %v182 = vsel %vm180, %v173, 0
      %184 = vmatprep.subr.mxu0 0.0
      %185 = vmatpush1.msra.mxu0 0.0
      %186 = vmatprep.subr.mxu0 0.0
      %187 = vmatpush1.msra.mxu0 0.0
      %188 = vmatprep.subr.mxu0 0.0
      %189 = vmatpush1.msra.mxu0 0.0
      %190 = vmatprep.subr.mxu0 0.0
      %191 = vmatpush1.msra.mxu0 0.0
      %192 = vmatprep.subr.mxu0 0.0
      %193 = vmatpush1.msra.mxu0 0.0
      %194 = vmatprep.subr.mxu0 0.0
      %195 = vmatpush1.msra.mxu0 0.0
      %196 = vmatprep.subr.mxu0 0.0
      %197 = vmatpush1.msra.mxu0 0.0
      %198 = vmatprep.subr.mxu0 0.0
      %199 = vmatpush1.msra.mxu0 0.0
      %200 = vmatprep.subr.mxu0 0.0
      %201 = vmatpush1.msra.mxu0 0.0
      %202 = vmatprep.subr.mxu0 0.0
      %203 = vmatpush1.msra.mxu0 0.0
      %204 = vmatprep.subr.mxu0 0.0
      %205 = vmatpush1.msra.mxu0 %v179
      %206 = vmatprep.subr.mxu0 0.0
      %207 = vmatpush1.msra.mxu0 %v178
      %208 = vmatprep.subr.mxu0 0.0
      %209 = vmatpush1.msra.mxu0 %v177
      %210 = vmatprep.subr.mxu0 0.0
      %211 = vmatpush1.msra.mxu0 %v176
      %212 = vmatprep.subr.mxu0 0.0
      %213 = vmatpush1.msra.mxu0 %v175
      %214 = vmatprep.subr.mxu0 0.0
      %215 = vmatpush1.msra.mxu0 %v174
      %216 = vmatprep.subr.mxu0 0.0
      %217 = vmatpush2.msra.mxu0 0.0
      %218 = vmatprep.subr.mxu0 0.0
      %219 = vmatpush2.msra.mxu0 0.0
      %220 = vmatprep.subr.mxu0 0.0
      %221 = vmatpush2.msra.mxu0 0.0
      %222 = vmatprep.subr.mxu0 0.0
      %223 = vmatpush2.msra.mxu0 0.0
      %224 = vmatprep.subr.mxu0 0.0
      %225 = vmatpush2.msra.mxu0 0.0
      %226 = vmatprep.subr.mxu0 0.0
      %227 = vmatpush2.msra.mxu0 0.0
      %228 = vmatprep.subr.mxu0 0.0
      %229 = vmatpush2.msra.mxu0 0.0
      %230 = vmatprep.subr.mxu0 0.0
      %231 = vmatpush2.msra.mxu0 0.0
      %232 = vmatprep.subr.mxu0 0.0
      %233 = vmatpush2.msra.mxu0 0.0
      %234 = vmatprep.subr.mxu0 0.0
      %235 = vmatpush2.msra.mxu0 0.0
      %236 = vmatprep.subr.mxu0 0.0
      %237 = vmatpush2.msra.mxu0 0.0
      %238 = vmatprep.subr.mxu0 0.0
      %239 = vmatpush2.msra.mxu0 0.0
      %240 = vmatprep.subr.mxu0 0.0
      %241 = vmatpush2.msra.mxu0 0.0
      %242 = vmatprep.subr.mxu0 0.0
      %243 = vmatpush2.msra.mxu0 0.0
      %244 = vmatprep.subr.mxu0 0.0
      %245 = vmatpush2.msra.mxu0 0.0
      %246 = vmatprep.subr.mxu0 0.0
      %247 = vmatpush2.msra.mxu0 0.0
      %248 = vmatprep.mubr.f32.mxu0 0.0
      %249 = vmatmul.mubr.f32.gmra.mxu0 %v182
      %v250 = vpop.f32.mrf.mxu0
      %v251 = vadd.f32 0.0, %v250
      %v252 = vpop.f32.mrf.mxu0
      %253 = vdwg.mxu0
      %254 = vmatprep.subr.mxu0 0.0
      %255 = vmatpush1.msra.mxu0 1.0
      %256 = vmatprep.subr.mxu0 0.0
      %257 = vmatpush1.msra.mxu0 1.0
      %258 = vmatprep.subr.mxu0 0.0
      %259 = vmatpush1.msra.mxu0 1.0
      %260 = vmatprep.subr.mxu0 0.0
      %261 = vmatpush1.msra.mxu0 1.0
      %262 = vmatprep.subr.mxu0 0.0
      %263 = vmatpush1.msra.mxu0 1.0
      %264 = vmatprep.subr.mxu0 0.0
      %265 = vmatpush1.msra.mxu0 1.0
      %266 = vmatprep.subr.mxu0 0.0
      %267 = vmatpush1.msra.mxu0 1.0
      %268 = vmatprep.subr.mxu0 0.0
      %269 = vmatpush1.msra.mxu0 1.0
      %270 = vmatprep.subr.mxu0 0.0
      %271 = vmatpush1.msra.mxu0 1.0
      %272 = vmatprep.subr.mxu0 0.0
      %273 = vmatpush1.msra.mxu0 1.0
      %274 = vmatprep.subr.mxu0 0.0
      %275 = vmatpush1.msra.mxu0 1.0
      %276 = vmatprep.subr.mxu0 0.0
      %277 = vmatpush1.msra.mxu0 1.0
      %278 = vmatprep.subr.mxu0 0.0
      %279 = vmatpush1.msra.mxu0 1.0
      %280 = vmatprep.subr.mxu0 0.0
      %281 = vmatpush1.msra.mxu0 1.0
      %282 = vmatprep.subr.mxu0 0.0
      %283 = vmatpush1.msra.mxu0 1.0
      %284 = vmatprep.subr.mxu0 0.0
      %285 = vmatpush1.msra.mxu0 1.0
      %286 = vmatprep.subr.mxu0 0.0
      %287 = vmatpush2.msra.mxu0 0.0
      %288 = vmatprep.subr.mxu0 0.0
      %289 = vmatpush2.msra.mxu0 0.0
      %290 = vmatprep.subr.mxu0 0.0
      %291 = vmatpush2.msra.mxu0 0.0
      %292 = vmatprep.subr.mxu0 0.0
      %293 = vmatpush2.msra.mxu0 0.0
      %294 = vmatprep.subr.mxu0 0.0
      %295 = vmatpush2.msra.mxu0 0.0
      %296 = vmatprep.subr.mxu0 0.0
      %297 = vmatpush2.msra.mxu0 0.0
      %298 = vmatprep.subr.mxu0 0.0
      %299 = vmatpush2.msra.mxu0 0.0
      %300 = vmatprep.subr.mxu0 0.0
      %301 = vmatpush2.msra.mxu0 0.0
      %302 = vmatprep.subr.mxu0 0.0
      %303 = vmatpush2.msra.mxu0 0.0
      %304 = vmatprep.subr.mxu0 0.0
      %305 = vmatpush2.msra.mxu0 0.0
      %306 = vmatprep.subr.mxu0 0.0
      %307 = vmatpush2.msra.mxu0 0.0
      %308 = vmatprep.subr.mxu0 0.0
      %309 = vmatpush2.msra.mxu0 0.0
      %310 = vmatprep.subr.mxu0 0.0
      %311 = vmatpush2.msra.mxu0 0.0
      %312 = vmatprep.subr.mxu0 0.0
      %313 = vmatpush2.msra.mxu0 0.0
      %314 = vmatprep.subr.mxu0 0.0
      %315 = vmatpush2.msra.mxu0 0.0
      %316 = vmatprep.subr.mxu0 0.0
      %317 = vmatpush2.msra.mxu0 0.0
      %318 = vmatprep.mubr.f32.mxu0 0.0
      %319 = vmatmul.mubr.f32.gmra.mxu0 %v251
      %v320 = vpop.f32.mrf.mxu0
      %v321 = vadd.f32 0.0, %v320
      %v322 = vpop.f32.mrf.mxu0
      %323 = vdwg.mxu0
      %v324 = vmul.f32 %v251, %v251
      %325 = vmatprep.subr.mxu0 0.0
      %326 = vmatpush1.msra.mxu0 1.0
      %327 = vmatprep.subr.mxu0 0.0
      %328 = vmatpush1.msra.mxu0 1.0
      %329 = vmatprep.subr.mxu0 0.0
      %330 = vmatpush1.msra.mxu0 1.0
      %331 = vmatprep.subr.mxu0 0.0
      %332 = vmatpush1.msra.mxu0 1.0
      %333 = vmatprep.subr.mxu0 0.0
      %334 = vmatpush1.msra.mxu0 1.0
      %335 = vmatprep.subr.mxu0 0.0
      %336 = vmatpush1.msra.mxu0 1.0
      %337 = vmatprep.subr.mxu0 0.0
      %338 = vmatpush1.msra.mxu0 1.0
      %339 = vmatprep.subr.mxu0 0.0
      %340 = vmatpush1.msra.mxu0 1.0
      %341 = vmatprep.subr.mxu0 0.0
      %342 = vmatpush1.msra.mxu0 1.0
      %343 = vmatprep.subr.mxu0 0.0
      %344 = vmatpush1.msra.mxu0 1.0
      %345 = vmatprep.subr.mxu0 0.0
      %346 = vmatpush1.msra.mxu0 1.0
      %347 = vmatprep.subr.mxu0 0.0
      %348 = vmatpush1.msra.mxu0 1.0
      %349 = vmatprep.subr.mxu0 0.0
      %350 = vmatpush1.msra.mxu0 1.0
      %351 = vmatprep.subr.mxu0 0.0
      %352 = vmatpush1.msra.mxu0 1.0
      %353 = vmatprep.subr.mxu0 0.0
      %354 = vmatpush1.msra.mxu0 1.0
      %355 = vmatprep.subr.mxu0 0.0
      %356 = vmatpush1.msra.mxu0 1.0
      %357 = vmatprep.subr.mxu0 0.0
      %358 = vmatpush2.msra.mxu0 0.0
      %359 = vmatprep.subr.mxu0 0.0
      %360 = vmatpush2.msra.mxu0 0.0
      %361 = vmatprep.subr.mxu0 0.0
      %362 = vmatpush2.msra.mxu0 0.0
      %363 = vmatprep.subr.mxu0 0.0
      %364 = vmatpush2.msra.mxu0 0.0
      %365 = vmatprep.subr.mxu0 0.0
      %366 = vmatpush2.msra.mxu0 0.0
      %367 = vmatprep.subr.mxu0 0.0
      %368 = vmatpush2.msra.mxu0 0.0
      %369 = vmatprep.subr.mxu0 0.0
      %370 = vmatpush2.msra.mxu0 0.0
      %371 = vmatprep.subr.mxu0 0.0
      %372 = vmatpush2.msra.mxu0 0.0
      %373 = vmatprep.subr.mxu0 0.0
      %374 = vmatpush2.msra.mxu0 0.0
      %375 = vmatprep.subr.mxu0 0.0
      %376 = vmatpush2.msra.mxu0 0.0
      %377 = vmatprep.subr.mxu0 0.0
      %378 = vmatpush2.msra.mxu0 0.0
      %379 = vmatprep.subr.mxu0 0.0
      %380 = vmatpush2.msra.mxu0 0.0
      %381 = vmatprep.subr.mxu0 0.0
      %382 = vmatpush2.msra.mxu0 0.0
      %383 = vmatprep.subr.mxu0 0.0
      %384 = vmatpush2.msra.mxu0 0.0
      %385 = vmatprep.subr.mxu0 0.0
      %386 = vmatpush2.msra.mxu0 0.0
      %387 = vmatprep.subr.mxu0 0.0
      %388 = vmatpush2.msra.mxu0 0.0
      %389 = vmatprep.mubr.f32.mxu0 0.0
      %390 = vmatmul.mubr.f32.gmra.mxu0 %v324
      %v391 = vpop.f32.mrf.mxu0
      %v392 = vadd.f32 0.0, %v391
      %v393 = vpop.f32.mrf.mxu0
      %394 = vdwg.mxu0
      %v395 = vmul.f32 %v321, 0.015625
      %v396 = vmul.f32 %v392, 0.015625
      %v397 = vmul.f32 %v395, %v395
      %v398 = vsub.f32 %v396, %v397
      %v399 = vmax.f32 %v398, 0.0
      %401 = vset.pattern.permute.xlu0 0
      %402 = vperm.xlu0 %401, %v395
      %v403 = vpop.permute.xlu0 %402
      %v405 = vsub.f32 %v251, %v403
      %v406 = vadd.f32 %v399, 1e-05
      %v407 = vrsqrt.pop %v406
      %409 = vset.pattern.permute.xlu0 0
      %410 = vperm.xlu0 %409, %v407
      %v411 = vpop.permute.xlu0 %410
      %v413 = vmul.f32 %v405, %v411
      %v414 = vmul.f32 %v413, 0.01
      %v415 = vmax.f32 %v413, %v414
      %416 = vst [vmem:[%s172] sm:$0xff] %v415
      %p417 = scmp.lt.s32.totalorder %s17, 1
      %s418 = scalar_select %p417, %s17, 1
      %p419 = scmp.lt.s32.totalorder %s18, 0
      %s420 = scalar_select %p419, %s18, 0
      %s421 = sadd.s32 %s420, %s418
      %s422 = smul.addr %s421, 8
      %s423 = scalar_lea.vmem %s2, %s422
      // Predicated region
      $region29: #{downsample.1} parent=27 // pred_check
        %p424 = pneg %p94
      $region30: #{downsample.1} parent=27 // pred_check_branch
        %426 = sbr.rel (%p424) target = $region32
      $region31: #{downsample.1} parent=27 // pred_region
        _
      $region32: #{downsample.1} parent=27 // pred_fallthru
        _
    $region28: #{downsample.1} parent=5 // pred_fallthru
      _
    %p427 = scmp.le.s32.totalorder 2, %s8
    // Predicated region
    $region33: #{downsample.1} parent=5 // pred_check
      %p428 = pneg %p427
    $region34: #{downsample.1} parent=5 // pred_check_branch
      %430 = sbr.rel (%p428) target = $region36
    $region35: #{downsample.1} parent=5 // pred_region
      %s431 = ssub.s32 %s8, 2
      // Predicated region
      $region37: #{downsample.1} parent=35 // pred_check
        %p432 = pneg %p100
      $region38: #{downsample.1} parent=35 // pred_check_branch
        %434 = sbr.rel (%p432) target = $region40
      $region39: #{downsample.1} parent=35 // pred_region
        %p435 = scmp.lt.s32.totalorder %s19, 1
        %s436 = scalar_select %p435, %s19, 1
        %p437 = scmp.lt.s32.totalorder %s20, 0
        %s438 = scalar_select %p437, %s20, 0
        %s439 = sadd.s32 %s438, %s436
        %s440 = smul.addr %s439, 8
        %s441 = scalar_lea.vmem %s2, %s440
      $region40: #{downsample.1} parent=35 // pred_fallthru
        _
    $region36: #{downsample.1} parent=5 // pred_fallthru
      _
  $region6: #{downsample.1} parent=0 // loop_footer
    %s12 = sadd.s32 1, %s8
  $region7: #{downsample.1} parent=0 // loop_footer_branch
    %7 = sbr.rel target = $region3
  $region8: #{downsample.1} parent=0 // loop_exit
    _

</llo_original>
